<compile_context>
chip_gen: v7x
topology: tpu7x:2x2x1
jax: 0.10.0
libtpu: 0.0.40
codegen_flags: <defaults>
</compile_context>

<pallas_src>
import functools
import math

import jax
import jax.numpy as jnp
from jax.experimental import pallas as pl
from jax.experimental.pallas import tpu as pltpu


def _laplace(x, mu=0.707107, sigma=0.282095):
    x = (x - mu) / (sigma * math.sqrt(2.0))
    return 0.5 * (1.0 + jax.lax.erf(x))


_ACTIVATIONS = {
    "sigmoid": jax.nn.sigmoid,
    "tanh": jnp.tanh,
    "relu": jax.nn.relu,
    "gelu": lambda x: jax.nn.gelu(x, approximate=False),  # match torch nn.GELU
    "elu": jax.nn.elu,
    "swish": jax.nn.silu,
    "silu": jax.nn.silu,
    "softplus": jax.nn.softplus,
    "sqrelu": lambda x: jnp.square(jax.nn.relu(x)),
    "relu2": lambda x: jnp.square(jax.nn.relu(x)),
    "laplace": _laplace,
    "id": lambda x: x,
    "identity": lambda x: x,
    "linear": lambda x: x,
    "none": lambda x: x,
}

# approx transcendental ops per gate element (advisory, for CostEstimate)
_TRANSC = {
    "sigmoid": 1, "tanh": 1, "silu": 1, "swish": 1, "softplus": 2,
    "gelu": 2, "elu": 1, "laplace": 1,
    "relu": 0, "sqrelu": 0, "relu2": 0,
    "id": 0, "identity": 0, "linear": 0, "none": 0,
}


def _sublane_pack(dtype):
    # sublane packing: 8 for 4-byte, 16 for 2-byte, 32 for 1-byte dtypes
    return max(8, 32 // jnp.dtype(dtype).itemsize)


def _round_up(x, m):
    return ((x + m - 1) // m) * m


def _cdiv(a, b):
    return (a + b - 1) // b


def _vmem_budgets():
    """(live_tile_budget_bytes, vmem_limit_bytes), generation-aware."""
    cap = None
    try:
        cap = int(pltpu.get_tpu_info().vmem_capacity_bytes)
    except Exception:
        cap = None
    if cap is None or cap <= 0:
        # Unknown part: conservative (safe on every generation).
        return 12 << 20, 32 << 20
    # Leave headroom under physical VMEM for compiler scratch.
    limit = min(64 << 20, max(32 << 20, cap - (16 << 20)))
    budget = min(28 << 20, limit // 2)
    return budget, limit


def _bf16_native_ok():
    """bf16 VPU/EUP exists on v6e/v7x; use f32 gate math elsewhere/unknown."""
    try:
        kind = jax.devices()[0].device_kind.lower()
    except Exception:
        return False
    return ("v6" in kind) or ("v7" in kind) or ("7x" in kind)


# ----------------------------------------------------------------------------
# kernels
# ----------------------------------------------------------------------------
def _glu_kernel_split(a_ref, g_ref, o_ref, *, act_fn, act_dtype):
    # a_ref / g_ref / o_ref: (tile_rows, tile_cols), lane-aligned blocks.
    # Ragged last row-block: padded reads feed garbage into act_fn; results
    # are discarded by the masked write (benign, TPUs don't trap).
    a = a_ref[...]
    g = g_ref[...].astype(act_dtype)
    o_ref[...] = (a * act_fn(g).astype(a.dtype)).astype(o_ref.dtype)


def _glu_kernel_fused(x_ref, o_ref, *, act_fn, act_dtype, half_cols):
    # Fallback for tiny lane-unaligned half sizes: x_ref is (tile_rows, 2*half_cols).
    a = x_ref[:, :half_cols]
    g = x_ref[:, half_cols:].astype(act_dtype)
    o_ref[...] = (a * act_fn(g).astype(a.dtype)).astype(o_ref.dtype)


# ----------------------------------------------------------------------------
# lane-aligned call
# ----------------------------------------------------------------------------
def _pick_col_tile(half_cols, pack, itemsize, live_budget):
    # Full half width whenever a minimal (pack-row) tile set (2 in + 1 out,
    # each double-buffered) fits the budget.
    if 6 * pack * half_cols * itemsize <= live_budget:
        return half_cols
    # Otherwise: largest divisor of half_cols that is a multiple of 128 and
    # below the per-dtype cap (~8K f32 / ~16K bf16 / ~32K int8 elements).
    cap_elems = max(128, 32768 // itemsize)
    d = half_cols // 128
    kmax = min(d, cap_elems // 128)
    for k in range(kmax, 0, -1):
        if d % k == 0:
            return 128 * k
    return 128


def _aligned_glu_call(value_arr, gate_arr, gate_in_second_half, half_cols, *,
                      act_fn, act_dtype, out_dtype, cost, live_budget,
                      vmem_limit):
    rows = value_arr.shape[0]
    itemsize = jnp.dtype(value_arr.dtype).itemsize
    pack = _sublane_pack(value_arr.dtype)

    tile_cols = _pick_col_tile(half_cols, pack, itemsize, live_budget)
    n_col_blocks = half_cols // tile_cols

    budget_rows = live_budget // (6 * tile_cols * itemsize)
    tile_rows = max(pack, (budget_rows // pack) * pack)
    tile_rows = min(tile_rows, _round_up(rows, pack))
    n_row_blocks = _cdiv(rows, tile_rows)

    # Megacore guard (v7x: 2 TCs). "parallel" only shards with >= 2 grid points;
    # prefer an even row-block count when there is a single column block.
    if n_col_blocks == 1:
        if n_row_blocks == 1 and rows > pack:
            tile_rows = max(pack, _round_up(_cdiv(rows, 2), pack))
            n_row_blocks = _cdiv(rows, tile_rows)
        elif n_row_blocks > 1 and n_row_blocks % 2 == 1:
            cand = max(pack, _round_up(_cdiv(rows, n_row_blocks + 1), pack))
            if cand < tile_rows and _cdiv(rows, cand) % 2 == 0:
                tile_rows = cand
                n_row_blocks = _cdiv(rows, tile_rows)

    grid = (n_row_blocks, n_col_blocks)
    off = n_col_blocks if gate_in_second_half else 0

    return pl.pallas_call(
        functools.partial(_glu_kernel_split, act_fn=act_fn,
                          act_dtype=act_dtype),
        out_shape=jax.ShapeDtypeStruct((rows, half_cols), out_dtype),
        grid_spec=pltpu.PrefetchScalarGridSpec(
            num_scalar_prefetch=0,
            grid=grid,
            in_specs=[
                pl.BlockSpec((tile_rows, tile_cols), lambda i, j: (i, j)),
                pl.BlockSpec((tile_rows, tile_cols),
                             lambda i, j: (i, j + off)),
            ],
            out_specs=pl.BlockSpec((tile_rows, tile_cols),
                                   lambda i, j: (i, j)),
        ),
        compiler_params=pltpu.CompilerParams(
            dimension_semantics=("parallel", "parallel"),
            vmem_limit_bytes=vmem_limit),
        cost_estimate=cost,
    )(value_arr, gate_arr)


# ----------------------------------------------------------------------------
# public wrapper
# ----------------------------------------------------------------------------
def glu_pallas(x, dim=-1, activation="sigmoid"):
    """GLU: split `x` in half along `dim`, return first_half * act(second_half)."""
    assert activation in _ACTIVATIONS, activation
    act_fn = _ACTIVATIONS[activation]

    ndim = x.ndim
    dim = dim % ndim
    split = x.shape[dim]
    assert split % 2 == 0, "GLU split dim must be even"
    half = split // 2

    outer = 1
    for s in x.shape[:dim]:
        outer *= s
    inner = 1
    for s in x.shape[dim + 1:]:
        inner *= s

    rows = outer
    half_cols = half * inner
    cols = 2 * half_cols
    # Free (row-major contiguous) reshape: no transpose, no HBM copy.
    x2d = x.reshape(rows, cols)

    itemsize = jnp.dtype(x.dtype).itemsize
    pack = _sublane_pack(x.dtype)
    live_budget, vmem_limit = _vmem_budgets()

    # bf16-native gate activation where the hardware has bf16 VPU/EUP.
    if x.dtype == jnp.bfloat16 and _bf16_native_ok():
        act_dtype = jnp.bfloat16
    else:
        act_dtype = jnp.float32

    cost = pl.CostEstimate(
        flops=2 * rows * half_cols,
        transcendentals=_TRANSC.get(activation, 1) * rows * half_cols,
        bytes_accessed=rows * (cols + half_cols) * itemsize,
    )

    if half_cols % 128 == 0:
        # --- lane-aligned path: BlockSpec-level value/gate split ---
        out2d = _aligned_glu_call(
            x2d, x2d, True, half_cols,
            act_fn=act_fn, act_dtype=act_dtype, out_dtype=x.dtype, cost=cost,
            live_budget=live_budget, vmem_limit=vmem_limit)
    elif half_cols < 1024:
        # --- tiny lane-unaligned shapes: fused full-width block ---
        budget_rows = max(pack,
                          live_budget // (2 * (cols + half_cols) * itemsize))
        tile_rows = max(pack, (budget_rows // pack) * pack)
        tile_rows = min(tile_rows, _round_up(rows, pack))
        grid = (_cdiv(rows, tile_rows),)

        out2d = pl.pallas_call(
            functools.partial(_glu_kernel_fused, act_fn=act_fn,
                              act_dtype=act_dtype, half_cols=half_cols),
            out_shape=jax.ShapeDtypeStruct((rows, half_cols), x.dtype),
            grid_spec=pltpu.PrefetchScalarGridSpec(
                num_scalar_prefetch=0,
                grid=grid,
                in_specs=[pl.BlockSpec((tile_rows, cols), lambda i: (i, 0))],
                out_specs=pl.BlockSpec((tile_rows, half_cols),
                                       lambda i: (i, 0)),
            ),
            compiler_params=pltpu.CompilerParams(
                dimension_semantics=("parallel",),
                vmem_limit_bytes=vmem_limit),
            cost_estimate=cost,
        )(x2d)
    else:
        # --- large lane-unaligned shapes: pad each half once in the wrapper
        #     to a 128 multiple so the unmasked-store aligned path is used.
        half_pad = _round_up(half_cols, 128)
        padw = ((0, 0), (0, half_pad - half_cols))
        a_p = jnp.pad(x2d[:, :half_cols], padw)
        g_p = jnp.pad(x2d[:, half_cols:], padw)
        out_p = _aligned_glu_call(
            a_p, g_p, False, half_pad,
            act_fn=act_fn, act_dtype=act_dtype, out_dtype=x.dtype, cost=cost,
            live_budget=live_budget, vmem_limit=vmem_limit)
        out2d = out_p[:, :half_cols]

    out_shape = x.shape[:dim] + (half,) + x.shape[dim + 1:]
    return out2d.reshape(out_shape)


def glu_reference(x, dim=-1, activation="sigmoid"):
    h = x.shape[dim] // 2
    a, g = jnp.split(x, [h], axis=dim)
    act = _ACTIVATIONS[activation](g.astype(jnp.float32)).astype(a.dtype)
    return (a * act).astype(x.dtype)


if __name__ == "__main__":
    key = jax.random.PRNGKey(0)
    k1, k2, k3, k4 = jax.random.split(key, 4)

    # 1) default GLU over last dim (small H=16 -> fused fallback path)
    x1 = jax.random.normal(k1, (2, 8, 32), dtype=jnp.float32)
    o1 = jax.block_until_ready(glu_pallas(x1, dim=-1, activation="sigmoid"))
    r1 = glu_reference(x1, dim=-1, activation="sigmoid")
    assert o1.shape == (2, 8, 16), o1.shape
    assert jnp.allclose(o1, r1, atol=1e-5, rtol=1e-5), "mismatch (case 1)"

    # 2) lane-aligned half (H=128) -> BlockSpec-level split path, silu gate
    x2 = jax.random.normal(k2, (8, 256), dtype=jnp.float32)
    o2 = jax.block_until_ready(glu_pallas(x2, dim=-1, activation="silu"))
    r2 = glu_reference(x2, dim=-1, activation="silu")
    assert o2.shape == (8, 128), o2.shape
    assert jnp.allclose(o2, r2, atol=1e-5, rtol=1e-5), "mismatch (case 2)"

    # 3) split over a non-last dim: no transpose, handled via flattened columns
    x3 = jax.random.normal(k3, (8, 4, 16, 16), dtype=jnp.float32)
    o3 = jax.block_until_ready(glu_pallas(x3, dim=1, activation="sigmoid"))
    r3 = glu_reference(x3, dim=1, activation="sigmoid")
    assert o3.shape == (8, 2, 16, 16), o3.shape
    assert jnp.allclose(o3, r3, atol=1e-5, rtol=1e-5), "mismatch (case 3)"

    # 4) bf16 input, gelu gate (bf16-native activation on v6e/v7x, f32 elsewhere)
    x4 = jax.random.normal(k4, (16, 256), dtype=jnp.bfloat16)
    o4 = jax.block_until_ready(glu_pallas(x4, dim=-1, activation="gelu"))
    r4 = glu_reference(x4, dim=-1, activation="gelu")
    assert o4.shape == (16, 128), o4.shape
    assert jnp.allclose(o4.astype(jnp.float32), r4.astype(jnp.float32),
                        atol=5e-2, rtol=5e-2), "mismatch (case 4)"

    print("KERNEL_OK")
</pallas_src>

<mosaic_0001>
module attributes {stable_mosaic.version = 11 : i64} {
  func.func @_glu_kernel_fused(%arg0: i32, %arg1: memref<16x32xf32, #tpu.memory_space<vmem>>, %arg2: memref<16x16xf32, #tpu.memory_space<vmem>>) attributes {dimension_semantics = [#tpu.dimension_semantics<parallel>], iteration_bounds = array<i64: 1>, scalar_prefetch = 0 : i64, scratch_operands = 0 : i64, tpu.core_type = #tpu.core_type<tc>, window_params = [{transform_indices = @transform_0, window_bounds = array<i64: 16, 32>}, {transform_indices = @transform_1, window_bounds = array<i64: 16, 16>}]} {
    %c0 = arith.constant 0 : index
    %c0_0 = arith.constant 0 : index
    %0 = vector.load %arg1[%c0, %c0_0] : memref<16x32xf32, #tpu.memory_space<vmem>>, vector<16x16xf32>
    %c0_1 = arith.constant 0 : index
    %c16 = arith.constant 16 : index
    %1 = vector.load %arg1[%c0_1, %c16] : memref<16x32xf32, #tpu.memory_space<vmem>>, vector<16x16xf32>
    %2 = arith.negf %1 : vector<16x16xf32>
    %3 = math.exp %2 : vector<16x16xf32>
    %cst = arith.constant 1.000000e+00 : f32
    %4 = vector.broadcast %cst : f32 to vector<16x16xf32>
    %5 = arith.addf %4, %3 : vector<16x16xf32>
    %6 = arith.divf %4, %5 : vector<16x16xf32>
    %7 = arith.mulf %0, %6 : vector<16x16xf32>
    %c0_2 = arith.constant 0 : index
    %c0_3 = arith.constant 0 : index
    %8 = vector.load %arg2[%c0_2, %c0_3] : memref<16x16xf32, #tpu.memory_space<vmem>>, vector<16x16xf32>
    tpu.vector_store %arg2[%c0_2, %c0_3], %7 {strides = array<i32>} : memref<16x16xf32, #tpu.memory_space<vmem>>, vector<16x16xf32>,
    return
  }
  func.func @transform_0(%arg0: i32) -> (i32, i32) {
    %c0_i32 = arith.constant 0 : i32
    %c0_i32_0 = arith.constant 0 : i32
    return %arg0, %c0_i32 : i32, i32
  }
  func.func @transform_1(%arg0: i32) -> (i32, i32) {
    %c0_i32 = arith.constant 0 : i32
    %c0_i32_0 = arith.constant 0 : i32
    return %arg0, %c0_i32 : i32, i32
  }
}

</mosaic_0001>

<llo_original>
// kernel: tpu_custom_call.1
$region0: #{tpu_custom_call.1}
  #allocation0 [shape = 'u32[]', space=smem, size = 0x4, offset = 0x4, fixed_abs, tag = 'smem constant byte address 0x4 - core index']
  #allocation1 [shape = 'u32[144,128]{1,0:T(1,128)}', space=vmem, size = 0x12000, scoped, tag = 'internal scratch']
  %s0 = inlined_call_operand.hbm [shape: f32[16,32], index: 0, kind: input, shape index: {}]
  %s1 = inlined_call_operand.hbm [shape: f32[16,16], index: 1, kind: output, shape index: {}]
  %s2 = sld [smem:[#allocation0]]
  $region18: #{tpu_custom_call.1} parent=0
    _
  %s4 = ssub.s32 1, %s2
  %s5 = scalar_select 0, %s4, %s2
  $region1: #{tpu_custom_call.1} parent=0
    #allocation2 [shape = 'u8[8192]{0}', space=vmem, size = 0x2000, scoped, tag = 'input window, operand 0, single buffered']
    #allocation3 [shape = 's32[1]{0}', space=sflag, size = 0x4, scoped, tag = 'scoped memory for tpu_custom_call.1']
    #allocation4 [shape = 's32[1]{0}', space=sflag, size = 0x4, scoped, tag = 'scoped memory for tpu_custom_call.1']
    #allocation5 [shape = 'u8[8192]{0}', space=vmem, size = 0x2000, scoped, tag = 'output window, operand 0, single buffered']
    %6 = vsyncpa [#allocation3], 0
    %7 = vsyncpa [#allocation4], 0
    // Predicated region
    $region2: #{tpu_custom_call.1} parent=1 // pred_check
      _
    $region3: #{tpu_custom_call.1} parent=1 // pred_check_branch
      %9 = sbr.rel (0) target = $region5
    $region4: #{tpu_custom_call.1} parent=1 // pred_region
      %s11 = ssub.s32 256, 256
      %12 = vsyncadd [#allocation3], %s11
      %s13 = sshll.u32 [#allocation2], 4
      %s14 = int_to_ptr.vmem [resolvable:$true] %s13
      %19 = dma.hbm_to_vmem [thread:$0]  %s0, 256, %s14, [#allocation3], 128, 128, 8
    $region5: #{tpu_custom_call.1} parent=1 // pred_fallthru
      _
    // Predicated region
    $region6: #{tpu_custom_call.1} parent=1 // pred_check
      _
    $region7: #{tpu_custom_call.1} parent=1 // pred_check_branch
      %21 = sbr.rel (0) target = $region9
    $region8: #{tpu_custom_call.1} parent=1 // pred_region
      %22 = dma.done [#allocation3], 256
    $region9: #{tpu_custom_call.1} parent=1 // pred_fallthru
      _
    %v23 = vld [vmem:[#allocation2] sm:$0xff]
    %v24 = vld [vmem:[#allocation2 + $0x8] sm:$0xff]
    %v25 = vxor.u32 %v23, 2147483648
    %v26 = vxor.u32 %v24, 2147483648
    %v27 = vmul.f32 %v25, 1.442695
    %v28 = vpow.pop %v27
    %v29 = vmul.f32 %v26, 1.442695
    %v30 = vpow.pop %v29
    %v31 = vadd.f32 %v28, 1.0
    %v32 = vadd.f32 %v30, 1.0
    %v33 = vrcp.pop %v31
    %v34 = vmul.f32 1.0, %v33
    %v35 = vrcp.pop %v32
    %v36 = vmul.f32 1.0, %v35
    %39 = vrot.lane.b32.xlu0 %v34, 112
    %v40 = vpop.permute.xlu0 %39
    %41 = vrot.lane.b32.xlu0 %v36, 112
    %v42 = vpop.permute.xlu0 %41
    %v45 = vmul.f32 %v23, %v40
    %v46 = vmul.f32 %v24, %v42
    %vm47 = vcmask 130048
    %48 = vst.msk [vmem:[#allocation5] sm:$0xff] %vm47, %v45
    %49 = vst.msk [vmem:[#allocation5 + $0x8] sm:$0xff] %vm47, %v46
    // Predicated region
    $region10: #{tpu_custom_call.1} parent=1 // pred_check
      _
    $region11: #{tpu_custom_call.1} parent=1 // pred_check_branch
      %51 = sbr.rel (0) target = $region13
    $region12: #{tpu_custom_call.1} parent=1 // pred_region
      %s53 = ssub.s32 256, 256
      %54 = vsyncadd [#allocation4], %s53
      %s55 = sshll.u32 [#allocation5], 4
      %s56 = int_to_ptr.vmem [resolvable:$true] %s55
      %61 = dma.vmem_to_hbm [thread:$0]  %s56, 256, %s1, [#allocation4], 128, 128, 8
    $region13: #{tpu_custom_call.1} parent=1 // pred_fallthru
      _
    // Predicated region
    $region14: #{tpu_custom_call.1} parent=1 // pred_check
      _
    $region15: #{tpu_custom_call.1} parent=1 // pred_check_branch
      %63 = sbr.rel (0) target = $region17
    $region16: #{tpu_custom_call.1} parent=1 // pred_region
      %64 = dma.done [#allocation4], 256
    $region17: #{tpu_custom_call.1} parent=1 // pred_fallthru
      _
    %65 = vsyncpa [#allocation3], 1
    %66 = vsyncpa [#allocation4], 1

</llo_original>
